<compile_context>
chip_gen: v6e
topology: v6e:2x2x1
jax: 0.10.0
libtpu: 0.0.40
codegen_flags: <defaults>
</compile_context>

<pallas_src>
import functools

import jax
import jax.numpy as jnp
from jax.experimental import pallas as pl
from jax.experimental.pallas import tpu as pltpu

H_PAD = 128  # hidden size 100 padded to one full 128-lane tile


def _round_up(n, m):
    return ((n + m - 1) // m) * m


def _model_kernel(x_ref, w1_ref, b1_ref, w2_ref, b2_ref, wh_ref, bh_ref,
                  out_ref, *, split_layer2):
    # layer 1 (policy || value fused along lanes): (TB, 2*H_PAD)
    x = x_ref[...].astype(jnp.bfloat16)
    h1 = jnp.tanh(
        jnp.dot(x, w1_ref[...], preferred_element_type=jnp.float32)
        + b1_ref[...])

    h1b = h1.astype(jnp.bfloat16)
    if split_layer2:
        # v5e (128x128 MXU): two 128^2 dots; the fused block-diagonal 256^2
        # dot would spend half its pushes multiplying structural zeros.
        zp = jnp.dot(h1b[:, :H_PAD], w2_ref[:H_PAD, :H_PAD],
                     preferred_element_type=jnp.float32)
        zv = jnp.dot(h1b[:, H_PAD:], w2_ref[H_PAD:, H_PAD:],
                     preferred_element_type=jnp.float32)
        z2 = jnp.concatenate([zp, zv], axis=1)
    else:
        # v6e/v7x: fused (TB,256)x(256,256) matches the native 256^2 MXU tile.
        z2 = jnp.dot(h1b, w2_ref[...], preferred_element_type=jnp.float32)
    h2 = jnp.tanh(z2 + b2_ref[...])

    # fused heads (raw, no softplus here): lanes [0:no)=mu,
    # [no:2no)=sigma_sq_raw, [2no]=v, rest zero padding.
    out_ref[...] = (
        jnp.dot(h2.astype(jnp.bfloat16), wh_ref[...],
                preferred_element_type=jnp.float32)
        + bh_ref[...])


def model_forward(x, packed, num_outputs, tb=256, split_layer2=None):
    """x: (B, num_inputs) f32. packed: dict from pack_params().
    Returns (mu, sigma_sq, v) with shapes (B, no), (B, no), (B, 1)."""
    B, d_in = x.shape
    out_pad = packed["wh"].shape[1]
    h2pad = packed["w1"].shape[1]

    if split_layer2 is None:
        kind = jax.devices()[0].device_kind.lower()
        # split layer-2 only on v5e-class chips (128x128 MXUs)
        split_layer2 = ("v5 lite" in kind) or ("v5e" in kind) or ("v5lite" in kind)

    # Minimal batch padding: fix nsteps first, then the tile size.
    # (B=300, tb=256) -> nsteps=2, TB=152, B_pad=304 instead of 512.
    nsteps = pl.cdiv(B, tb)
    if nsteps > 1 and nsteps % 2 == 1:
        nsteps += 1  # even step count -> balanced 2-way megacore split on v7x
    TB = _round_up(pl.cdiv(B, nsteps), 8)
    B_pad = nsteps * TB
    if B_pad != B:
        x = jnp.pad(x, ((0, B_pad - B), (0, 0)))
    grid = (nsteps,)

    resident = lambda shape: pl.BlockSpec(shape, lambda i: (0, 0))

    fused = pl.pallas_call(
        functools.partial(_model_kernel, split_layer2=split_layer2),
        out_shape=jax.ShapeDtypeStruct((B_pad, out_pad), jnp.float32),
        grid=grid,
        in_specs=[
            pl.BlockSpec((TB, d_in), lambda i: (i, 0)),   # x: tiled over batch
            resident((d_in, h2pad)),                      # w1_cat        (bf16)
            resident((1, h2pad)),                         # b1_cat        (f32)
            resident((h2pad, h2pad)),                     # w2_blockdiag  (bf16)
            resident((1, h2pad)),                         # b2_cat        (f32)
            resident((h2pad, out_pad)),                   # w_head        (bf16)
            resident((1, out_pad)),                       # b_head        (f32)
        ],
        out_specs=pl.BlockSpec((TB, out_pad), lambda i: (i, 0)),
        compiler_params=pltpu.CompilerParams(
            dimension_semantics=("parallel",)),
    )(x, packed["w1"], packed["b1"], packed["w2"], packed["b2"],
      packed["wh"], packed["bh"])

    no = num_outputs
    mu = fused[:B, :no]
    # softplus hoisted out of the kernel: only `no` lanes actually need it.
    sigma_sq = jax.nn.softplus(fused[:B, no:2 * no])
    v = fused[:B, 2 * no:2 * no + 1]
    return mu, sigma_sq, v


def init_params(key, num_inputs, num_outputs, h1=100, h2=100):
    """Deterministic PyTorch-style Linear init (uniform +-1/sqrt(fan_in)),
    weights stored transposed as (in, out), biases as (1, out)."""
    def linear(k, fan_in, fan_out):
        kw, kb = jax.random.split(k)
        bound = 1.0 / jnp.sqrt(float(fan_in))
        w = jax.random.uniform(kw, (fan_in, fan_out), jnp.float32, -bound, bound)
        b = jax.random.uniform(kb, (1, fan_out), jnp.float32, -bound, bound)
        return w, b

    keys = jax.random.split(key, 7)
    p_w1, p_b1 = linear(keys[0], num_inputs, h1)
    p_w2, p_b2 = linear(keys[1], h1, h2)
    v_w1, v_b1 = linear(keys[2], num_inputs, h1)
    v_w2, v_b2 = linear(keys[3], h1, h2)
    mu_w, mu_b = linear(keys[4], h2, num_outputs)
    sg_w, sg_b = linear(keys[5], h2, num_outputs)
    v_w, v_b = linear(keys[6], h2, 1)
    return dict(
        p_w1=p_w1, p_b1=p_b1, p_w2=p_w2, p_b2=p_b2,
        v_w1=v_w1, v_b1=v_b1, v_w2=v_w2, v_b2=v_b2,
        mu_w=mu_w, mu_b=mu_b, sg_w=sg_w, sg_b=sg_b,
        v_w=v_w, v_b=v_b,
    )


def pack_params(p, num_inputs, num_outputs, h1=100, h2=100, h_pad=H_PAD):
    """Zero-pad hidden dims to 128 and fuse layers/heads into lane-dense,
    tile-aligned matrices.  Weights are stored bf16 (MXU inputs); biases stay
    f32 (added after the f32-accumulated matmul)."""
    no = num_outputs
    out_pad = _round_up(2 * no + 1, 128)
    f32 = jnp.float32

    w1 = jnp.zeros((num_inputs, 2 * h_pad), f32)
    w1 = w1.at[:, :h1].set(p["p_w1"]).at[:, h_pad:h_pad + h1].set(p["v_w1"])
    b1 = jnp.zeros((1, 2 * h_pad), f32)
    b1 = b1.at[:, :h1].set(p["p_b1"]).at[:, h_pad:h_pad + h1].set(p["v_b1"])

    w2 = jnp.zeros((2 * h_pad, 2 * h_pad), f32)
    w2 = (w2.at[:h1, :h2].set(p["p_w2"])
            .at[h_pad:h_pad + h1, h_pad:h_pad + h2].set(p["v_w2"]))
    b2 = jnp.zeros((1, 2 * h_pad), f32)
    b2 = b2.at[:, :h2].set(p["p_b2"]).at[:, h_pad:h_pad + h2].set(p["v_b2"])

    wh = jnp.zeros((2 * h_pad, out_pad), f32)
    wh = (wh.at[:h2, :no].set(p["mu_w"])
            .at[:h2, no:2 * no].set(p["sg_w"])
            .at[h_pad:h_pad + h2, 2 * no:2 * no + 1].set(p["v_w"]))
    bh = jnp.zeros((1, out_pad), f32)
    bh = (bh.at[:, :no].set(p["mu_b"])
            .at[:, no:2 * no].set(p["sg_b"])
            .at[:, 2 * no:2 * no + 1].set(p["v_b"]))

    bf16 = jnp.bfloat16
    return dict(w1=w1.astype(bf16), b1=b1,
                w2=w2.astype(bf16), b2=b2,
                wh=wh.astype(bf16), bh=bh)


def _reference(x, p):
    h = jnp.tanh(x @ p["p_w1"] + p["p_b1"])
    h = jnp.tanh(h @ p["p_w2"] + p["p_b2"])
    mu = h @ p["mu_w"] + p["mu_b"]
    sigma = jax.nn.softplus(h @ p["sg_w"] + p["sg_b"])
    g = jnp.tanh(x @ p["v_w1"] + p["v_b1"])
    g = jnp.tanh(g @ p["v_w2"] + p["v_b2"])
    v = g @ p["v_w"] + p["v_b"]
    return mu, sigma, v


if __name__ == "__main__":
    num_inputs, num_outputs = 8, 4

    key = jax.random.PRNGKey(0)
    k_params, k_x1, k_x2 = jax.random.split(key, 3)
    params = init_params(k_params, num_inputs, num_outputs)
    packed = pack_params(params, num_inputs, num_outputs)

    # bf16 matmul operands (f32 accumulate): tolerance loosened vs the pure
    # f32 version per the performance review.
    TOL = 5e-2

    # small case (single grid step) and a larger case exercising the batch
    # grid (B=300 -> two 152-row tiles), padding and pipelining.
    for batch, kx in ((2, k_x1), (300, k_x2)):
        x = jax.random.normal(kx, (batch, num_inputs), jnp.float32)
        mu, sigma_sq, v = jax.block_until_ready(
            model_forward(x, packed, num_outputs))

        ref_mu, ref_sigma, ref_v = _reference(x, params)
        assert mu.shape == (batch, num_outputs)
        assert sigma_sq.shape == (batch, num_outputs)
        assert v.shape == (batch, 1)
        assert jnp.allclose(mu, ref_mu, atol=TOL)
        assert jnp.allclose(sigma_sq, ref_sigma, atol=TOL)
        assert jnp.allclose(v, ref_v, atol=TOL)

    print("KERNEL_OK")
</pallas_src>

<mosaic_0001>
module attributes {stable_mosaic.version = 11 : i64} {
  func.func @_model_kernel(%arg0: i32, %arg1: memref<8x8xf32, #tpu.memory_space<vmem>>, %arg2: memref<8x256xbf16, #tpu.memory_space<vmem>>, %arg3: memref<1x256xf32, #tpu.memory_space<vmem>>, %arg4: memref<256x256xbf16, #tpu.memory_space<vmem>>, %arg5: memref<1x256xf32, #tpu.memory_space<vmem>>, %arg6: memref<256x128xbf16, #tpu.memory_space<vmem>>, %arg7: memref<1x128xf32, #tpu.memory_space<vmem>>, %arg8: memref<8x128xf32, #tpu.memory_space<vmem>>) attributes {dimension_semantics = [#tpu.dimension_semantics<parallel>], iteration_bounds = array<i64: 1>, scalar_prefetch = 0 : i64, scratch_operands = 0 : i64, tpu.core_type = #tpu.core_type<tc>, window_params = [{transform_indices = @transform_0, window_bounds = array<i64: 8, 8>}, {pipeline_mode = #tpu.pipeline_mode<synchronous>, transform_indices = @transform_1, window_bounds = array<i64: 8, 256>}, {pipeline_mode = #tpu.pipeline_mode<synchronous>, transform_indices = @transform_2, window_bounds = array<i64: 1, 256>}, {pipeline_mode = #tpu.pipeline_mode<synchronous>, transform_indices = @transform_3, window_bounds = array<i64: 256, 256>}, {pipeline_mode = #tpu.pipeline_mode<synchronous>, transform_indices = @transform_4, window_bounds = array<i64: 1, 256>}, {pipeline_mode = #tpu.pipeline_mode<synchronous>, transform_indices = @transform_5, window_bounds = array<i64: 256, 128>}, {pipeline_mode = #tpu.pipeline_mode<synchronous>, transform_indices = @transform_6, window_bounds = array<i64: 1, 128>}, {transform_indices = @transform_7, window_bounds = array<i64: 8, 128>}]} {
    %c0 = arith.constant 0 : index
    %c0_0 = arith.constant 0 : index
    %0 = vector.load %arg1[%c0, %c0_0] : memref<8x8xf32, #tpu.memory_space<vmem>>, vector<8x8xf32>
    %1 = arith.truncf %0 : vector<8x8xf32> to vector<8x8xbf16>
    %c0_1 = arith.constant 0 : index
    %c0_2 = arith.constant 0 : index
    %2 = vector.load %arg2[%c0_1, %c0_2] : memref<8x256xbf16, #tpu.memory_space<vmem>>, vector<8x256xbf16>
    %cst = arith.constant dense<0.000000e+00> : vector<8x256xf32>
    %3 = tpu.matmul %1, %2, %cst {dimension_numbers = #tpu.dot_dimension_numbers<[1], [0], [0], [1], [0, 0, 1, 1], [], []>} : vector<8x8xbf16>, vector<8x256xbf16>, vector<8x256xf32> -> vector<8x256xf32>
    %c0_3 = arith.constant 0 : index
    %c0_4 = arith.constant 0 : index
    %4 = vector.load %arg3[%c0_3, %c0_4] : memref<1x256xf32, #tpu.memory_space<vmem>>, vector<1x256xf32>
    %5 = vector.broadcast %4 : vector<1x256xf32> to vector<8x256xf32>
    %6 = arith.addf %3, %5 : vector<8x256xf32>
    %7 = math.tanh %6 : vector<8x256xf32>
    %8 = arith.truncf %7 : vector<8x256xf32> to vector<8x256xbf16>
    %c0_5 = arith.constant 0 : index
    %c0_6 = arith.constant 0 : index
    %9 = vector.load %arg4[%c0_5, %c0_6] : memref<256x256xbf16, #tpu.memory_space<vmem>>, vector<256x256xbf16>
    %cst_7 = arith.constant dense<0.000000e+00> : vector<8x256xf32>
    %10 = tpu.matmul %8, %9, %cst_7 {dimension_numbers = #tpu.dot_dimension_numbers<[1], [0], [0], [1], [0, 0, 1, 1], [], []>} : vector<8x256xbf16>, vector<256x256xbf16>, vector<8x256xf32> -> vector<8x256xf32>
    %c0_8 = arith.constant 0 : index
    %c0_9 = arith.constant 0 : index
    %11 = vector.load %arg5[%c0_8, %c0_9] : memref<1x256xf32, #tpu.memory_space<vmem>>, vector<1x256xf32>
    %12 = vector.broadcast %11 : vector<1x256xf32> to vector<8x256xf32>
    %13 = arith.addf %10, %12 : vector<8x256xf32>
    %14 = math.tanh %13 : vector<8x256xf32>
    %15 = arith.truncf %14 : vector<8x256xf32> to vector<8x256xbf16>
    %c0_10 = arith.constant 0 : index
    %c0_11 = arith.constant 0 : index
    %16 = vector.load %arg6[%c0_10, %c0_11] : memref<256x128xbf16, #tpu.memory_space<vmem>>, vector<256x128xbf16>
    %cst_12 = arith.constant dense<0.000000e+00> : vector<8x128xf32>
    %17 = tpu.matmul %15, %16, %cst_12 {dimension_numbers = #tpu.dot_dimension_numbers<[1], [0], [0], [1], [0, 0, 1, 1], [], []>} : vector<8x256xbf16>, vector<256x128xbf16>, vector<8x128xf32> -> vector<8x128xf32>
    %c0_13 = arith.constant 0 : index
    %c0_14 = arith.constant 0 : index
    %18 = vector.load %arg7[%c0_13, %c0_14] : memref<1x128xf32, #tpu.memory_space<vmem>>, vector<1x128xf32>
    %19 = vector.broadcast %18 : vector<1x128xf32> to vector<8x128xf32>
    %20 = arith.addf %17, %19 : vector<8x128xf32>
    %c0_15 = arith.constant 0 : index
    %c0_16 = arith.constant 0 : index
    %21 = vector.load %arg8[%c0_15, %c0_16] : memref<8x128xf32, #tpu.memory_space<vmem>>, vector<8x128xf32>
    tpu.vector_store %arg8[%c0_15, %c0_16], %20 {strides = array<i32>} : memref<8x128xf32, #tpu.memory_space<vmem>>, vector<8x128xf32>,
    return
  }
  func.func @transform_0(%arg0: i32) -> (i32, i32) {
    %c0_i32 = arith.constant 0 : i32
    %c0_i32_0 = arith.constant 0 : i32
    return %arg0, %c0_i32 : i32, i32
  }
  func.func @transform_1(%arg0: i32) -> (i32, i32) {
    %c0_i32 = arith.constant 0 : i32
    %c0_i32_0 = arith.constant 0 : i32
    %c0_i32_1 = arith.constant 0 : i32
    return %c0_i32, %c0_i32_0 : i32, i32
  }
  func.func @transform_2(%arg0: i32) -> (i32, i32) {
    %c0_i32 = arith.constant 0 : i32
    %c0_i32_0 = arith.constant 0 : i32
    %c0_i32_1 = arith.constant 0 : i32
    return %c0_i32, %c0_i32_0 : i32, i32
  }
  func.func @transform_3(%arg0: i32) -> (i32, i32) {
    %c0_i32 = arith.constant 0 : i32
    %c0_i32_0 = arith.constant 0 : i32
    %c0_i32_1 = arith.constant 0 : i32
    return %c0_i32, %c0_i32_0 : i32, i32
  }
  func.func @transform_4(%arg0: i32) -> (i32, i32) {
    %c0_i32 = arith.constant 0 : i32
    %c0_i32_0 = arith.constant 0 : i32
    %c0_i32_1 = arith.constant 0 : i32
    return %c0_i32, %c0_i32_0 : i32, i32
  }
  func.func @transform_5(%arg0: i32) -> (i32, i32) {
    %c0_i32 = arith.constant 0 : i32
    %c0_i32_0 = arith.constant 0 : i32
    %c0_i32_1 = arith.constant 0 : i32
    return %c0_i32, %c0_i32_0 : i32, i32
  }
  func.func @transform_6(%arg0: i32) -> (i32, i32) {
    %c0_i32 = arith.constant 0 : i32
    %c0_i32_0 = arith.constant 0 : i32
    %c0_i32_1 = arith.constant 0 : i32
    return %c0_i32, %c0_i32_0 : i32, i32
  }
  func.func @transform_7(%arg0: i32) -> (i32, i32) {
    %c0_i32 = arith.constant 0 : i32
    %c0_i32_0 = arith.constant 0 : i32
    return %arg0, %c0_i32 : i32, i32
  }
}

</mosaic_0001>

<llo_original>
// kernel: tpu_custom_call.1
$region0: #{tpu_custom_call.1}
  #allocation0 [shape = 'u32[]', space=smem, size = 0x4, offset = 0x4, fixed_abs, tag = 'smem constant byte address 0x4 - core index']
  #allocation1 [shape = 'u32[144,128]{1,0:T(1,128)}', space=vmem, size = 0x12000, scoped, tag = 'internal scratch']
  %s0 = inlined_call_operand.hbm [shape: f32[8,8], index: 0, kind: input, shape index: {}]
  %s1 = inlined_call_operand.hbm [shape: bf16[8,256], index: 1, kind: input, shape index: {}]
  %s2 = inlined_call_operand.vmem [shape: f32[1,256], index: 2, kind: input, shape index: {}]
  %s3 = inlined_call_operand.hbm [shape: bf16[256,256], index: 3, kind: input, shape index: {}]
  %s4 = inlined_call_operand.vmem [shape: f32[1,256], index: 4, kind: input, shape index: {}]
  %s5 = inlined_call_operand.hbm [shape: bf16[256,128], index: 5, kind: input, shape index: {}]
  %s6 = inlined_call_operand.vmem [shape: f32[1,128], index: 6, kind: input, shape index: {}]
  %s7 = inlined_call_operand.hbm [shape: f32[8,128], index: 7, kind: output, shape index: {}]
  %s8 = sld [smem:[#allocation0]]
  $region54: #{tpu_custom_call.1} parent=0
    _
  %s10 = ssub.s32 1, %s8
  %s11 = scalar_select 0, %s10, %s8
  $region1: #{tpu_custom_call.1} parent=0
    #allocation2 [shape = 'u8[4096]{0}', space=vmem, size = 0x1000, scoped, tag = 'input window, operand 0, single buffered']
    #allocation3 [shape = 's32[1]{0}', space=sflag, size = 0x4, scoped, tag = 'scoped memory for tpu_custom_call.1']
    #allocation4 [shape = 's32[1]{0}', space=sflag, size = 0x4, scoped, tag = 'scoped memory for tpu_custom_call.1']
    #allocation5 [shape = 'u8[4096]{0}', space=vmem, size = 0x1000, scoped, tag = 'input window, operand 1, single buffered']
    #allocation6 [shape = 's32[1]{0}', space=sflag, size = 0x4, scoped, tag = 'scoped memory for tpu_custom_call.1']
    #allocation7 [shape = 'u8[131072]{0}', space=vmem, size = 0x20000, scoped, tag = 'input window, operand 3, single buffered']
    #allocation8 [shape = 'u8[65536]{0}', space=vmem, size = 0x10000, scoped, tag = 'input window, operand 5, single buffered']
    #allocation9 [shape = 's32[1]{0}', space=sflag, size = 0x4, scoped, tag = 'scoped memory for tpu_custom_call.1']
    #allocation10 [shape = 'u8[4096]{0}', space=vmem, size = 0x1000, scoped, tag = 'output window, operand 0, single buffered']
    %12 = vsyncpa [#allocation3], 0
    %13 = vsyncpa [#allocation6], 0
    %14 = vsyncpa [#allocation9], 0
    %15 = vsyncpa [#allocation4], 0
    // Predicated region
    $region2: #{tpu_custom_call.1} parent=1 // pred_check
      _
    $region3: #{tpu_custom_call.1} parent=1 // pred_check_branch
      %17 = sbr.rel (0) target = $region5
    $region4: #{tpu_custom_call.1} parent=1 // pred_region
      %s19 = ssub.s32 128, 128
      %20 = vsyncadd [#allocation3], %s19
      %s22 = sshll.u32 [#allocation2], 4
      %s23 = int_to_ptr.vmem [resolvable:$true] %s22
      %25 = dma.hbm_to_vmem [thread:$0]  %s0, 128, %s23, [#allocation3]
    $region5: #{tpu_custom_call.1} parent=1 // pred_fallthru
      _
    // Predicated region
    $region6: #{tpu_custom_call.1} parent=1 // pred_check
      _
    $region7: #{tpu_custom_call.1} parent=1 // pred_check_branch
      %27 = sbr.rel (0) target = $region9
    $region8: #{tpu_custom_call.1} parent=1 // pred_region
      %s29 = ssub.s32 128, 128
      %30 = vsyncadd [#allocation6], %s29
      %s32 = sshll.u32 [#allocation5], 4
      %s33 = int_to_ptr.vmem [resolvable:$true] %s32
      %35 = dma.hbm_to_vmem [thread:$0]  %s1, 128, %s33, [#allocation6]
    $region9: #{tpu_custom_call.1} parent=1 // pred_fallthru
      _
    // Predicated region
    $region10: #{tpu_custom_call.1} parent=1 // pred_check
      _
    $region11: #{tpu_custom_call.1} parent=1 // pred_check_branch
      %37 = sbr.rel (0) target = $region13
    $region12: #{tpu_custom_call.1} parent=1 // pred_region
      _
    $region13: #{tpu_custom_call.1} parent=1 // pred_fallthru
      _
    // Predicated region
    $region14: #{tpu_custom_call.1} parent=1 // pred_check
      _
    $region15: #{tpu_custom_call.1} parent=1 // pred_check_branch
      %39 = sbr.rel (0) target = $region17
    $region16: #{tpu_custom_call.1} parent=1 // pred_region
      %s41 = ssub.s32 4096, 4096
      %42 = vsyncadd [#allocation6], %s41
      %s43 = sshll.u32 [#allocation7], 4
      %s44 = int_to_ptr.vmem [resolvable:$true] %s43
      %49 = dma.hbm_to_vmem [thread:$0]  %s3, 4096, %s44, [#allocation6], 128, 128, 8
    $region17: #{tpu_custom_call.1} parent=1 // pred_fallthru
      _
    // Predicated region
    $region18: #{tpu_custom_call.1} parent=1 // pred_check
      _
    $region19: #{tpu_custom_call.1} parent=1 // pred_check_branch
      %51 = sbr.rel (0) target = $region21
    $region20: #{tpu_custom_call.1} parent=1 // pred_region
      _
    $region21: #{tpu_custom_call.1} parent=1 // pred_fallthru
      _
    // Predicated region
    $region22: #{tpu_custom_call.1} parent=1 // pred_check
      _
    $region23: #{tpu_custom_call.1} parent=1 // pred_check_branch
      %53 = sbr.rel (0) target = $region25
    $region24: #{tpu_custom_call.1} parent=1 // pred_region
      %s55 = ssub.s32 2048, 2048
      %56 = vsyncadd [#allocation9], %s55
      %s57 = sshll.u32 [#allocation8], 4
      %s58 = int_to_ptr.vmem [resolvable:$true] %s57
      %63 = dma.hbm_to_vmem [thread:$0]  %s5, 2048, %s58, [#allocation9], 64, 64, 4
    $region25: #{tpu_custom_call.1} parent=1 // pred_fallthru
      _
    // Predicated region
    $region26: #{tpu_custom_call.1} parent=1 // pred_check
      _
    $region27: #{tpu_custom_call.1} parent=1 // pred_check_branch
      %65 = sbr.rel (0) target = $region29
    $region28: #{tpu_custom_call.1} parent=1 // pred_region
      _
    $region29: #{tpu_custom_call.1} parent=1 // pred_fallthru
      _
    // Predicated region
    $region30: #{tpu_custom_call.1} parent=1 // pred_check
      _
    $region31: #{tpu_custom_call.1} parent=1 // pred_check_branch
      %67 = sbr.rel (0) target = $region33
    $region32: #{tpu_custom_call.1} parent=1 // pred_region
      %68 = dma.done [#allocation3], 128
    $region33: #{tpu_custom_call.1} parent=1 // pred_fallthru
      _
    // Predicated region
    $region34: #{tpu_custom_call.1} parent=1 // pred_check
      _
    $region35: #{tpu_custom_call.1} parent=1 // pred_check_branch
      %70 = sbr.rel (0) target = $region37
    $region36: #{tpu_custom_call.1} parent=1 // pred_region
      %71 = dma.done [#allocation6], 128
    $region37: #{tpu_custom_call.1} parent=1 // pred_fallthru
      _
    // Predicated region
    $region38: #{tpu_custom_call.1} parent=1 // pred_check
      _
    $region39: #{tpu_custom_call.1} parent=1 // pred_check_branch
      %73 = sbr.rel (0) target = $region41
    $region40: #{tpu_custom_call.1} parent=1 // pred_region
      %74 = dma.done [#allocation6], 4096
    $region41: #{tpu_custom_call.1} parent=1 // pred_fallthru
      _
    // Predicated region
    $region42: #{tpu_custom_call.1} parent=1 // pred_check
      _
    $region43: #{tpu_custom_call.1} parent=1 // pred_check_branch
      %76 = sbr.rel (0) target = $region45
    $region44: #{tpu_custom_call.1} parent=1 // pred_region
      %77 = dma.done [#allocation9], 2048
    $region45: #{tpu_custom_call.1} parent=1 // pred_fallthru
      _
    %v79 = vld [vmem:[#allocation2] sm:$0xff]
    %v80 = vpack.c.bf16 %v79, %v79
    %v81 = vld [vmem:[#allocation5] sm:$0xff]
    %v82 = vld [vmem:[%s2] sm:$0x3]
    %v84 = vlaneseq
    %v85 = vshrl.u32 %v84, 7
    %v86 = vsub.s32 0, %v85
    %v87 = vrot.slane %v82, %v86
    %v88 = vlaneseq
    %v89 = vshrl.u32 %v88, 7
    %v90 = vsub.s32 1, %v89
    %v91 = vrot.slane %v82, %v90
    %v95 = vunpack.c.l.b16 %v81
    %v96 = vunpack.c.h.b16 %v81
    %v97 = vpack.c.b16 %v95, %v95
    %v98 = vpack.c.b16 %v96, %v96
    %vm99 = vcmask 64512
    %v101 = vsel %vm99, %v80, 0
    %vm103 = vcmask 1043456
    %v105 = vsel %vm103, %v97, 0
    %v108 = vsel %vm103, %v98, 0
    %110 = vmatprep.subr.bf16.mxu0 0
    %111 = vmatpush1.bf16.msra.mxu0 0
    %112 = vmatprep.subr.bf16.mxu0 0
    %113 = vmatpush1.bf16.msra.mxu0 0
    %114 = vmatprep.subr.bf16.mxu0 0
    %115 = vmatpush1.bf16.msra.mxu0 0
    %116 = vmatprep.subr.bf16.mxu0 0
    %117 = vmatpush1.bf16.msra.mxu0 0
    %118 = vmatprep.subr.bf16.mxu0 0
    %119 = vmatpush1.bf16.msra.mxu0 0
    %120 = vmatprep.subr.bf16.mxu0 0
    %121 = vmatpush1.bf16.msra.mxu0 0
    %122 = vmatprep.subr.bf16.mxu0 0
    %123 = vmatpush1.bf16.msra.mxu0 0
    %124 = vmatprep.subr.bf16.mxu0 %v108
    %125 = vmatpush1.bf16.msra.mxu0 %v105
    %126 = vmatprep.subr.bf16.mxu0 0
    %127 = vmatpush2.bf16.msra.mxu0 0
    %128 = vmatprep.subr.bf16.mxu0 0
    %129 = vmatpush2.bf16.msra.mxu0 0
    %130 = vmatprep.subr.bf16.mxu0 0
    %131 = vmatpush2.bf16.msra.mxu0 0
    %132 = vmatprep.subr.bf16.mxu0 0
    %133 = vmatpush2.bf16.msra.mxu0 0
    %134 = vmatprep.subr.bf16.mxu0 0
    %135 = vmatpush2.bf16.msra.mxu0 0
    %136 = vmatprep.subr.bf16.mxu0 0
    %137 = vmatpush2.bf16.msra.mxu0 0
    %138 = vmatprep.subr.bf16.mxu0 0
    %139 = vmatpush2.bf16.msra.mxu0 0
    %140 = vmatprep.subr.bf16.mxu0 0
    %141 = vmatpush2.bf16.msra.mxu0 0
    %142 = vmatprep.mubr.bf16.mxu0 0
    %143 = vmatmul.mubr.bf16.gmra.mxu0 %v101
    %v144 = vpop.f32.mrf.mxu0
    %v145 = vadd.f32 %v87, %v144
    %v146 = vpop.f32.mrf.mxu0
    %v147 = vadd.f32 %v91, %v146
    %v148 = vpop.f32.mrf.mxu0
    %v149 = vpop.f32.mrf.mxu0
    %150 = vdwg.mxu0
    %v151 = vtanh.pop %v145
    %v152 = vtanh.pop %v147
    %v153 = vpack.c.bf16 %v151, %v151
    %v154 = vpack.c.bf16 %v152, %v152
    %v155 = vld [vmem:[#allocation7] sm:$0xff]
    %v156 = vld [vmem:[#allocation7 + $0x8] sm:$0xff]
    %v157 = vld [vmem:[#allocation7 + $0x10] sm:$0xff]
    %v158 = vld [vmem:[#allocation7 + $0x18] sm:$0xff]
    %v159 = vld [vmem:[#allocation7 + $0x20] sm:$0xff]
    %v160 = vld [vmem:[#allocation7 + $0x28] sm:$0xff]
    %v161 = vld [vmem:[#allocation7 + $0x30] sm:$0xff]
    %v162 = vld [vmem:[#allocation7 + $0x38] sm:$0xff]
    %v163 = vld [vmem:[#allocation7 + $0x40] sm:$0xff]
    %v164 = vld [vmem:[#allocation7 + $0x48] sm:$0xff]
    %v165 = vld [vmem:[#allocation7 + $0x50] sm:$0xff]
    %v166 = vld [vmem:[#allocation7 + $0x58] sm:$0xff]
    %v167 = vld [vmem:[#allocation7 + $0x60] sm:$0xff]
    %v168 = vld [vmem:[#allocation7 + $0x68] sm:$0xff]
    %v169 = vld [vmem:[#allocation7 + $0x70] sm:$0xff]
    %v170 = vld [vmem:[#allocation7 + $0x78] sm:$0xff]
    %v171 = vld [vmem:[#allocation7 + $0x80] sm:$0xff]
    %v172 = vld [vmem:[#allocation7 + $0x88] sm:$0xff]
    %v173 = vld [vmem:[#allocation7 + $0x90] sm:$0xff]
    %v174 = vld [vmem:[#allocation7 + $0x98] sm:$0xff]
    %v175 = vld [vmem:[#allocation7 + $0xa0] sm:$0xff]
    %v176 = vld [vmem:[#allocation7 + $0xa8] sm:$0xff]
    %v177 = vld [vmem:[#allocation7 + $0xb0] sm:$0xff]
    %v178 = vld [vmem:[#allocation7 + $0xb8] sm:$0xff]
    %v179 = vld [vmem:[#allocation7 + $0xc0] sm:$0xff]
    %v180 = vld [vmem:[#allocation7 + $0xc8] sm:$0xff]
    %v181 = vld [vmem:[#allocation7 + $0xd0] sm:$0xff]
    %v182 = vld [vmem:[#allocation7 + $0xd8] sm:$0xff]
    %v183 = vld [vmem:[#allocation7 + $0xe0] sm:$0xff]
    %v184 = vld [vmem:[#allocation7 + $0xe8] sm:$0xff]
    %v185 = vld [vmem:[#allocation7 + $0xf0] sm:$0xff]
    %v186 = vld [vmem:[#allocation7 + $0xf8] sm:$0xff]
    %v187 = vld [vmem:[%s4] sm:$0x3]
    %v189 = vlaneseq
    %v190 = vshrl.u32 %v189, 7
    %v191 = vsub.s32 0, %v190
    %v192 = vrot.slane %v187, %v191
    %v193 = vlaneseq
    %v194 = vshrl.u32 %v193, 7
    %v195 = vsub.s32 1, %v194
    %v196 = vrot.slane %v187, %v195
    %v231 = vunpack.c.l.b16 %v155
    %v232 = vunpack.c.h.b16 %v155
    %v233 = vunpack.c.l.b16 %v156
    %v234 = vunpack.c.h.b16 %v156
    %v235 = vunpack.c.l.b16 %v157
    %v236 = vunpack.c.h.b16 %v157
    %v237 = vunpack.c.l.b16 %v158
    %v238 = vunpack.c.h.b16 %v158
    %v239 = vunpack.c.l.b16 %v159
    %v240 = vunpack.c.h.b16 %v159
    %v241 = vunpack.c.l.b16 %v160
    %v242 = vunpack.c.h.b16 %v160
    %v243 = vunpack.c.l.b16 %v161
    %v244 = vunpack.c.h.b16 %v161
    %v245 = vunpack.c.l.b16 %v162
    %v246 = vunpack.c.h.b16 %v162
    %v247 = vunpack.c.l.b16 %v163
    %v248 = vunpack.c.h.b16 %v163
    %v249 = vunpack.c.l.b16 %v164
    %v250 = vunpack.c.h.b16 %v164
    %v251 = vunpack.c.l.b16 %v165
    %v252 = vunpack.c.h.b16 %v165
    %v253 = vunpack.c.l.b16 %v166
    %v254 = vunpack.c.h.b16 %v166
    %v255 = vunpack.c.l.b16 %v167
    %v256 = vunpack.c.h.b16 %v167
    %v257 = vunpack.c.l.b16 %v168
    %v258 = vunpack.c.h.b16 %v168
    %v259 = vunpack.c.l.b16 %v169
    %v260 = vunpack.c.h.b16 %v169
    %v261 = vunpack.c.l.b16 %v170
    %v262 = vunpack.c.h.b16 %v170
    %v263 = vunpack.c.l.b16 %v171
    %v264 = vunpack.c.h.b16 %v171
    %v265 = vunpack.c.l.b16 %v172
    %v266 = vunpack.c.h.b16 %v172
    %v267 = vunpack.c.l.b16 %v173
    %v268 = vunpack.c.h.b16 %v173
    %v269 = vunpack.c.l.b16 %v174
    %v270 = vunpack.c.h.b16 %v174
    %v271 = vunpack.c.l.b16 %v175
    %v272 = vunpack.c.h.b16 %v175
    %v273 = vunpack.c.l.b16 %v176
    %v274 = vunpack.c.h.b16 %v176
    %v275 = vunpack.c.l.b16 %v177
    %v276 = vunpack.c.h.b16 %v177
    %v277 = vunpack.c.l.b16 %v178
    %v278 = vunpack.c.h.b16 %v178
    %v279 = vunpack.c.l.b16 %v179
    %v280 = vunpack.c.h.b16 %v179
    %v281 = vunpack.c.l.b16 %v180
    %v282 = vunpack.c.h.b16 %v180
    %v283 = vunpack.c.l.b16 %v181
    %v284 = vunpack.c.h.b16 %v181
    %v285 = vunpack.c.l.b16 %v182
    %v286 = vunpack.c.h.b16 %v182
    %v287 = vunpack.c.l.b16 %v183
    %v288 = vunpack.c.h.b16 %v183
    %v289 = vunpack.c.l.b16 %v184
    %v290 = vunpack.c.h.b16 %v184
    %v291 = vunpack.c.l.b16 %v185
    %v292 = vunpack.c.h.b16 %v185
    %v293 = vunpack.c.l.b16 %v186
    %v294 = vunpack.c.h.b16 %v186
    %v295 = vpack.c.b16 %v233, %v231
    %v296 = vpack.c.b16 %v234, %v232
    %v297 = vpack.c.b16 %v237, %v235
    %v298 = vpack.c.b16 %v238, %v236
    %v299 = vpack.c.b16 %v241, %v239
    %v300 = vpack.c.b16 %v242, %v240
    %v301 = vpack.c.b16 %v245, %v243
    %v302 = vpack.c.b16 %v246, %v244
    %v303 = vpack.c.b16 %v249, %v247
    %v304 = vpack.c.b16 %v250, %v248
    %v305 = vpack.c.b16 %v253, %v251
    %v306 = vpack.c.b16 %v254, %v252
    %v307 = vpack.c.b16 %v257, %v255
    %v308 = vpack.c.b16 %v258, %v256
    %v309 = vpack.c.b16 %v261, %v259
    %v310 = vpack.c.b16 %v262, %v260
    %v311 = vpack.c.b16 %v265, %v263
    %v312 = vpack.c.b16 %v266, %v264
    %v313 = vpack.c.b16 %v269, %v267
    %v314 = vpack.c.b16 %v270, %v268
    %v315 = vpack.c.b16 %v273, %v271
    %v316 = vpack.c.b16 %v274, %v272
    %v317 = vpack.c.b16 %v277, %v275
    %v318 = vpack.c.b16 %v278, %v276
    %v319 = vpack.c.b16 %v281, %v279
    %v320 = vpack.c.b16 %v282, %v280
    %v321 = vpack.c.b16 %v285, %v283
    %v322 = vpack.c.b16 %v286, %v284
    %v323 = vpack.c.b16 %v289, %v287
    %v324 = vpack.c.b16 %v290, %v288
    %v325 = vpack.c.b16 %v293, %v291
    %v326 = vpack.c.b16 %v294, %v292
    %359 = vmatprep.subr.bf16.mxu0 %v310
    %360 = vmatpush1.bf16.msra.mxu0 %v309
    %361 = vmatprep.subr.bf16.mxu0 %v308
    %362 = vmatpush1.bf16.msra.mxu0 %v307
    %363 = vmatprep.subr.bf16.mxu0 %v306
    %364 = vmatpush1.bf16.msra.mxu0 %v305
    %365 = vmatprep.subr.bf16.mxu0 %v304
    %366 = vmatpush1.bf16.msra.mxu0 %v303
    %367 = vmatprep.subr.bf16.mxu0 %v302
    %368 = vmatpush1.bf16.msra.mxu0 %v301
    %369 = vmatprep.subr.bf16.mxu0 %v300
    %370 = vmatpush1.bf16.msra.mxu0 %v299
    %371 = vmatprep.subr.bf16.mxu0 %v298
    %372 = vmatpush1.bf16.msra.mxu0 %v297
    %373 = vmatprep.subr.bf16.mxu0 %v296
    %374 = vmatpush1.bf16.msra.mxu0 %v295
    %375 = vmatprep.subr.bf16.mxu0 %v326
    %376 = vmatpush2.bf16.msra.mxu0 %v325
    %377 = vmatprep.subr.bf16.mxu0 %v324
    %378 = vmatpush2.bf16.msra.mxu0 %v323
    %379 = vmatprep.subr.bf16.mxu0 %v322
    %380 = vmatpush2.bf16.msra.mxu0 %v321
    %381 = vmatprep.subr.bf16.mxu0 %v320
    %382 = vmatpush2.bf16.msra.mxu0 %v319
    %383 = vmatprep.subr.bf16.mxu0 %v318
    %384 = vmatpush2.bf16.msra.mxu0 %v317
    %385 = vmatprep.subr.bf16.mxu0 %v316
    %386 = vmatpush2.bf16.msra.mxu0 %v315
    %387 = vmatprep.subr.bf16.mxu0 %v314
    %388 = vmatpush2.bf16.msra.mxu0 %v313
    %389 = vmatprep.subr.bf16.mxu0 %v312
    %390 = vmatpush2.bf16.msra.mxu0 %v311
    %391 = vmatprep.mubr.bf16.mxu0 %v154
    %392 = vmatmul.mubr.bf16.gmra.mxu0 %v153
    %v393 = vpop.f32.mrf.mxu0
    %v394 = vadd.f32 %v192, %v393
    %v395 = vpop.f32.mrf.mxu0
    %v396 = vadd.f32 %v196, %v395
    %v397 = vpop.f32.mrf.mxu0
    %v398 = vpop.f32.mrf.mxu0
    %399 = vdwg.mxu0
    %v400 = vtanh.pop %v394
    %v401 = vtanh.pop %v396
    %v402 = vpack.c.bf16 %v400, %v400
    %v403 = vpack.c.bf16 %v401, %v401
    %v404 = vld [vmem:[#allocation8] sm:$0xf]
    %v405 = vld [vmem:[#allocation8 + $0x4] sm:$0xf]
    %v406 = vld [vmem:[#allocation8 + $0x8] sm:$0xf]
    %v407 = vld [vmem:[#allocation8 + $0xc] sm:$0xf]
    %v408 = vld [vmem:[#allocation8 + $0x10] sm:$0xf]
    %v409 = vld [vmem:[#allocation8 + $0x14] sm:$0xf]
    %v410 = vld [vmem:[#allocation8 + $0x18] sm:$0xf]
    %v411 = vld [vmem:[#allocation8 + $0x1c] sm:$0xf]
    %v412 = vld [vmem:[#allocation8 + $0x20] sm:$0xf]
    %v413 = vld [vmem:[#allocation8 + $0x24] sm:$0xf]
    %v414 = vld [vmem:[#allocation8 + $0x28] sm:$0xf]
    %v415 = vld [vmem:[#allocation8 + $0x2c] sm:$0xf]
    %v416 = vld [vmem:[#allocation8 + $0x30] sm:$0xf]
    %v417 = vld [vmem:[#allocation8 + $0x34] sm:$0xf]
    %v418 = vld [vmem:[#allocation8 + $0x38] sm:$0xf]
    %v419 = vld [vmem:[#allocation8 + $0x3c] sm:$0xf]
    %v420 = vld [vmem:[#allocation8 + $0x40] sm:$0xf]
    %v421 = vld [vmem:[#allocation8 + $0x44] sm:$0xf]
    %v422 = vld [vmem:[#allocation8 + $0x48] sm:$0xf]
    %v423 = vld [vmem:[#allocation8 + $0x4c] sm:$0xf]
    %v424 = vld [vmem:[#allocation8 + $0x50] sm:$0xf]
    %v425 = vld [vmem:[#allocation8 + $0x54] sm:$0xf]
    %v426 = vld [vmem:[#allocation8 + $0x58] sm:$0xf]
    %v427 = vld [vmem:[#allocation8 + $0x5c] sm:$0xf]
    %v428 = vld [vmem:[#allocation8 + $0x60] sm:$0xf]
    %v429 = vld [vmem:[#allocation8 + $0x64] sm:$0xf]
    %v430 = vld [vmem:[#allocation8 + $0x68] sm:$0xf]
    %v431 = vld [vmem:[#allocation8 + $0x6c] sm:$0xf]
    %v432 = vld [vmem:[#allocation8 + $0x70] sm:$0xf]
    %v433 = vld [vmem:[#allocation8 + $0x74] sm:$0xf]
    %v434 = vld [vmem:[#allocation8 + $0x78] sm:$0xf]
    %v435 = vld [vmem:[#allocation8 + $0x7c] sm:$0xf]
    %v436 = vld [vmem:[%s6] sm:$0x1]
    %v438 = vlaneseq
    %v439 = vshrl.u32 %v438, 7
    %v440 = vsub.s32 0, %v439
    %v441 = vrot.slane %v436, %v440
    %v475 = vunpack.c.l.b16 %v404
    %v476 = vunpack.c.l.b16 %v405
    %v477 = vunpack.c.l.b16 %v406
    %v478 = vunpack.c.l.b16 %v407
    %v479 = vunpack.c.l.b16 %v408
    %v480 = vunpack.c.l.b16 %v409
    %v481 = vunpack.c.l.b16 %v410
    %v482 = vunpack.c.l.b16 %v411
    %v483 = vunpack.c.l.b16 %v412
    %v484 = vunpack.c.l.b16 %v413
    %v485 = vunpack.c.l.b16 %v414
    %v486 = vunpack.c.l.b16 %v415
    %v487 = vunpack.c.l.b16 %v416
    %v488 = vunpack.c.l.b16 %v417
    %v489 = vunpack.c.l.b16 %v418
    %v490 = vunpack.c.l.b16 %v419
    %v491 = vunpack.c.l.b16 %v420
    %v492 = vunpack.c.l.b16 %v421
    %v493 = vunpack.c.l.b16 %v422
    %v494 = vunpack.c.l.b16 %v423
    %v495 = vunpack.c.l.b16 %v424
    %v496 = vunpack.c.l.b16 %v425
    %v497 = vunpack.c.l.b16 %v426
    %v498 = vunpack.c.l.b16 %v427
    %v499 = vunpack.c.l.b16 %v428
    %v500 = vunpack.c.l.b16 %v429
    %v501 = vunpack.c.l.b16 %v430
    %v502 = vunpack.c.l.b16 %v431
    %v503 = vunpack.c.l.b16 %v432
    %v504 = vunpack.c.l.b16 %v433
    %v505 = vunpack.c.l.b16 %v434
    %v506 = vunpack.c.l.b16 %v435
    %v507 = vpack.c.b16 %v476, %v475
    %v508 = vpack.c.b16 %v478, %v477
    %v509 = vpack.c.b16 %v480, %v479
    %v510 = vpack.c.b16 %v482, %v481
    %v511 = vpack.c.b16 %v484, %v483
    %v512 = vpack.c.b16 %v486, %v485
    %v513 = vpack.c.b16 %v488, %v487
    %v514 = vpack.c.b16 %v490, %v489
    %v515 = vpack.c.b16 %v492, %v491
    %v516 = vpack.c.b16 %v494, %v493
    %v517 = vpack.c.b16 %v496, %v495
    %v518 = vpack.c.b16 %v498, %v497
    %v519 = vpack.c.b16 %v500, %v499
    %v520 = vpack.c.b16 %v502, %v501
    %v521 = vpack.c.b16 %v504, %v503
    %v522 = vpack.c.b16 %v506, %v505
    %539 = vmatprep.subr.bf16.mxu0 0
    %540 = vmatpush1.bf16.msra.mxu0 %v514
    %541 = vmatprep.subr.bf16.mxu0 0
    %542 = vmatpush1.bf16.msra.mxu0 %v513
    %543 = vmatprep.subr.bf16.mxu0 0
    %544 = vmatpush1.bf16.msra.mxu0 %v512
    %545 = vmatprep.subr.bf16.mxu0 0
    %546 = vmatpush1.bf16.msra.mxu0 %v511
    %547 = vmatprep.subr.bf16.mxu0 0
    %548 = vmatpush1.bf16.msra.mxu0 %v510
    %549 = vmatprep.subr.bf16.mxu0 0
    %550 = vmatpush1.bf16.msra.mxu0 %v509
    %551 = vmatprep.subr.bf16.mxu0 0
    %552 = vmatpush1.bf16.msra.mxu0 %v508
    %553 = vmatprep.subr.bf16.mxu0 0
    %554 = vmatpush1.bf16.msra.mxu0 %v507
    %555 = vmatprep.subr.bf16.mxu0 0
    %556 = vmatpush2.bf16.msra.mxu0 %v522
    %557 = vmatprep.subr.bf16.mxu0 0
    %558 = vmatpush2.bf16.msra.mxu0 %v521
    %559 = vmatprep.subr.bf16.mxu0 0
    %560 = vmatpush2.bf16.msra.mxu0 %v520
    %561 = vmatprep.subr.bf16.mxu0 0
    %562 = vmatpush2.bf16.msra.mxu0 %v519
    %563 = vmatprep.subr.bf16.mxu0 0
    %564 = vmatpush2.bf16.msra.mxu0 %v518
    %565 = vmatprep.subr.bf16.mxu0 0
    %566 = vmatpush2.bf16.msra.mxu0 %v517
    %567 = vmatprep.subr.bf16.mxu0 0
    %568 = vmatpush2.bf16.msra.mxu0 %v516
    %569 = vmatprep.subr.bf16.mxu0 0
    %570 = vmatpush2.bf16.msra.mxu0 %v515
    %571 = vmatprep.mubr.bf16.mxu0 %v403
    %572 = vmatmul.mubr.bf16.gmra.mxu0 %v402
    %v573 = vpop.f32.mrf.mxu0
    %v574 = vadd.f32 %v441, %v573
    %v575 = vpop.f32.mrf.mxu0
    %v576 = vpop.f32.mrf.mxu0
    %v577 = vpop.f32.mrf.mxu0
    %578 = vdwg.mxu0
    %579 = vst [vmem:[#allocation10] sm:$0xff] %v574
    // Predicated region
    $region46: #{tpu_custom_call.1} parent=1 // pred_check
      _
    $region47: #{tpu_custom_call.1} parent=1 // pred_check_branch
      %581 = sbr.rel (0) target = $region49
    $region48: #{tpu_custom_call.1} parent=1 // pred_region
      %s583 = ssub.s32 128, 128
      %584 = vsyncadd [#allocation4], %s583
      %s586 = sshll.u32 [#allocation10], 4
      %s587 = int_to_ptr.vmem [resolvable:$true] %s586
      %589 = dma.vmem_to_hbm [thread:$0]  %s587, 128, %s7, [#allocation4]
    $region49: #{tpu_custom_call.1} parent=1 // pred_fallthru
      _
    // Predicated region
    $region50: #{tpu_custom_call.1} parent=1 // pred_check
      _
    $region51: #{tpu_custom_call.1} parent=1 // pred_check_branch
      %591 = sbr.rel (0) target = $region53
    $region52: #{tpu_custom_call.1} parent=1 // pred_region
      %592 = dma.done [#allocation4], 128
    $region53: #{tpu_custom_call.1} parent=1 // pred_fallthru
      _
    %593 = vsyncpa [#allocation3], 1
    %594 = vsyncpa [#allocation6], 1
    %595 = vsyncpa [#allocation9], 1
    %596 = vsyncpa [#allocation4], 1

</llo_original>
